<compile_context>
chip_gen: v7x
topology: tpu7x:2x2x1
jax: 0.10.0
libtpu: 0.0.40
codegen_flags: <defaults>
</compile_context>

<pallas_src>
import functools

import jax
import jax.numpy as jnp
from jax.experimental import pallas as pl
from jax.experimental.pallas import tpu as pltpu


def _multvae_tile_kernel(z_ref, tgt_ref, mu_ref, logvar_ref, nll_ref, kl_ref,
                         *, batch, tile_rows):
    """One batch tile -> per-tile partial sums of NLL and (un-annealed) KL."""
    # Valid-row mask for the ragged last tile (rows >= batch are Pallas block
    # padding with unspecified contents; they must not reach the sums).
    row0 = pl.program_id(0) * tile_rows
    row_ids = row0 + jax.lax.broadcasted_iota(jnp.int32, (tile_rows, 1), 0)
    valid = row_ids < batch                                          # (TB, 1)

    z = z_ref[...]                                                   # (TB, C) native dtype
    # Target pick on the raw (native-dtype) logits: only one nonzero per row, so
    # a native-dtype row-sum is exact; keeps the shifted f32 sweep single-consumer.
    col_ids = jax.lax.broadcasted_iota(jnp.int32, z.shape, 1)
    onehot = col_ids == tgt_ref[...]                                 # (TB, C) bool
    picked = jnp.sum(jnp.where(onehot, z, jnp.zeros_like(z)),
                     axis=1, keepdims=True).astype(jnp.float32)      # (TB, 1)
    # TODO(synk): out-of-range targets (e.g. ignore_index=-100 or t >= C) pick
    # nothing and yield nll = logsumexp(z); torch.CrossEntropyLoss would differ.

    # Numerically stable logsumexp; `zf - row_max` feeds only the exp/sum.
    zf = z.astype(jnp.float32)
    row_max = jnp.max(zf, axis=1, keepdims=True)                     # (TB, 1)
    sum_exp = jnp.sum(jnp.exp(zf - row_max), axis=1, keepdims=True)  # (TB, 1)
    nll_rows = jnp.log(sum_exp) + row_max - picked                   # (TB, 1)

    # KL rows: 0.5 * sum_d( exp(logvar) - logvar + mu^2 - 1 )
    mu = mu_ref[...].astype(jnp.float32)
    lv = logvar_ref[...].astype(jnp.float32)
    kl_rows = 0.5 * jnp.sum(jnp.exp(lv) - lv + mu * mu - 1.0,
                            axis=1, keepdims=True)                   # (TB, 1)

    nll_sum = jnp.sum(jnp.where(valid, nll_rows, 0.0))
    kl_sum = jnp.sum(jnp.where(valid, kl_rows, 0.0))
    # Lane-dense (1, 128) output blocks -> unmasked stores, tiny wrapper reduce.
    nll_ref[...] = jnp.full((1, 128), nll_sum, dtype=jnp.float32)
    kl_ref[...] = jnp.full((1, 128), kl_sum, dtype=jnp.float32)


def _pick_batch_tile(batch, num_classes, latent_dim, z_itemsize, mu_itemsize):
    """Batch tile from a VMEM working-set budget (DMA buffers + f32 temporaries)."""
    per_row = (2 * num_classes * z_itemsize      # z block, double-buffered DMA
               + 4 * latent_dim * mu_itemsize    # mu + logvar blocks, double-buffered
               + 2 * 128 * 4                     # (tb,1) int32 targets, lane-padded
               + 3 * num_classes * 4             # f32 cast + iota/mask + exp sweep
               + 2 * latent_dim * 4)             # f32 casts of mu / logvar
    budget = 28 << 20                            # safe on v5e/v6e (128 MiB) and v7x (64 MiB)
    tb = max(16, (budget // per_row) // 16 * 16)  # multiple of 16 -> native bf16 tiling

    if batch <= 8:
        return int(batch)                        # single exact tile (block == batch extent)
    tb = min(tb, (batch // 8) * 8)               # never exceed the batch extent

    # Megacore (v7x): keep >= 2 grid steps so the "parallel" axis shards across cores.
    if -(-batch // tb) < 2 and tb >= 16:
        half = ((tb // 2) + 7) // 8 * 8
        if -(-batch // half) >= 2:
            tb = half
    return int(tb)


@jax.jit
def _multvae_partials(z, targets_2d, mu, logvar):
    B, C = z.shape
    D = mu.shape[1]

    tb = _pick_batch_tile(B, C, D, z.dtype.itemsize, mu.dtype.itemsize)
    n_tiles = -(-B // tb)

    # Honest VMEM budget: DMA buffers (double-buffered), lane-padded targets,
    # f32 intermediates, tiny lane-dense outputs, plus headroom for Mosaic scratch.
    working = (2 * tb * C * z.dtype.itemsize
               + 4 * tb * D * mu.dtype.itemsize
               + 2 * tb * 128 * 4
               + 3 * tb * C * 4
               + 2 * tb * D * 4
               + 4 * 128 * 4)
    vmem_limit = int(working + (8 << 20))

    cost = pl.CostEstimate(
        flops=6 * B * C + 5 * B * D,
        transcendentals=B * C + B * D,
        bytes_accessed=int(z.size * z.dtype.itemsize
                           + (mu.size + logvar.size) * mu.dtype.itemsize
                           + targets_2d.size * 4
                           + 2 * n_tiles * 128 * 4),
    )

    kernel = functools.partial(_multvae_tile_kernel, batch=B, tile_rows=tb)
    nll_p, kl_p = pl.pallas_call(
        kernel,
        out_shape=(
            jax.ShapeDtypeStruct((n_tiles, 128), jnp.float32),
            jax.ShapeDtypeStruct((n_tiles, 128), jnp.float32),
        ),
        grid_spec=pltpu.PrefetchScalarGridSpec(
            num_scalar_prefetch=0,
            grid=(n_tiles,),
            in_specs=[
                pl.BlockSpec((tb, C), lambda i: (i, 0)),   # z tile
                pl.BlockSpec((tb, 1), lambda i: (i, 0)),   # targets tile
                pl.BlockSpec((tb, D), lambda i: (i, 0)),   # mu tile
                pl.BlockSpec((tb, D), lambda i: (i, 0)),   # logvar tile
            ],
            out_specs=[
                pl.BlockSpec((1, 128), lambda i: (i, 0)),  # per-tile NLL partial
                pl.BlockSpec((1, 128), lambda i: (i, 0)),  # per-tile KL partial
            ],
        ),
        compiler_params=pltpu.CompilerParams(
            dimension_semantics=("parallel",),
            vmem_limit_bytes=vmem_limit,
        ),
        cost_estimate=cost,
    )(z, targets_2d, mu, logvar)

    # Tiny finalization: n_tiles partial sums -> means over the true batch B.
    nll = jnp.sum(nll_p[:, 0]) / B
    kl_unannealed = jnp.sum(kl_p[:, 0]) / B
    return nll, kl_unannealed


def mult_vae_loss(logits, targets, mu_unused, logvar_unused,
                  anneal_cap, n_update, total_anneal_steps):
    """Mirrors MultVAELoss.forward: logits is the tuple (z, mu, logvar)."""
    z, mu, logvar = logits
    # TODO(synk): the reference mutates self.n_update / reads self.total_anneal_steps
    # (never initialized in __init__); we use the function arguments instead.
    if total_anneal_steps > 0:
        anneal = min(anneal_cap, 1.0 * n_update / total_anneal_steps)
    else:
        anneal = anneal_cap

    targets_2d = targets.reshape(-1, 1).astype(jnp.int32)
    nll, kl_unannealed = _multvae_partials(z, targets_2d, mu, logvar)
    kl = kl_unannealed * jnp.float32(anneal)
    loss = nll + kl
    return loss, {"nll": nll, "KL": kl}


def _reference(z, targets, mu, logvar, anneal):
    """Pure-JAX reference for a sanity check."""
    lse = jax.scipy.special.logsumexp(z.astype(jnp.float32), axis=1)
    picked = jnp.take_along_axis(z.astype(jnp.float32),
                                 targets.reshape(-1, 1), axis=1)[:, 0]
    nll = jnp.mean(lse - picked)
    lv = logvar.astype(jnp.float32)
    m = mu.astype(jnp.float32)
    kl = 0.5 * jnp.mean(jnp.sum(-lv + jnp.exp(lv) + m * m - 1.0, axis=1)) * anneal
    return nll, kl


if __name__ == "__main__":
    # Small deterministic example: batch=8, num_classes=256, latent=32.
    key = jax.random.PRNGKey(0)
    k1, k2, k3, k4 = jax.random.split(key, 4)
    B, C, D = 8, 256, 32

    z = jax.random.normal(k1, (B, C), dtype=jnp.float32)
    targets = jax.random.randint(k2, (B,), 0, C, dtype=jnp.int32)
    mu = jax.random.normal(k3, (B, D), dtype=jnp.float32)
    logvar = jax.random.normal(k4, (B, D), dtype=jnp.float32) * 0.1

    anneal_cap, n_update, total_anneal_steps = 0.2, 100, 2000
    loss, loss_dict = mult_vae_loss(
        (z, mu, logvar), targets, None, None,
        anneal_cap=anneal_cap, n_update=n_update,
        total_anneal_steps=total_anneal_steps,
    )
    jax.block_until_ready(loss)
    jax.block_until_ready(loss_dict["nll"])
    jax.block_until_ready(loss_dict["KL"])

    # Sanity check against a pure-JAX reference.
    anneal = min(anneal_cap, 1.0 * n_update / total_anneal_steps)
    nll_ref, kl_ref = _reference(z, targets, mu, logvar, anneal)
    assert jnp.allclose(loss_dict["nll"], nll_ref, rtol=1e-3, atol=1e-5)
    assert jnp.allclose(loss_dict["KL"], kl_ref, rtol=1e-3, atol=1e-5)

    print("KERNEL_OK")
</pallas_src>

<mosaic_0001>
module attributes {stable_mosaic.version = 11 : i64} {
  func.func @_multvae_tile_kernel(%arg0: i32, %arg1: memref<8x256xf32, #tpu.memory_space<vmem>>, %arg2: memref<8x1xi32, #tpu.memory_space<vmem>>, %arg3: memref<8x32xf32, #tpu.memory_space<vmem>>, %arg4: memref<8x32xf32, #tpu.memory_space<vmem>>, %arg5: memref<1x128xf32, #tpu.memory_space<vmem>>, %arg6: memref<1x128xf32, #tpu.memory_space<vmem>>) attributes {dimension_semantics = [#tpu.dimension_semantics<parallel>], iteration_bounds = array<i64: 1>, scalar_prefetch = 0 : i64, scratch_operands = 0 : i64, tpu.core_type = #tpu.core_type<tc>, window_params = [{transform_indices = @transform_0, window_bounds = array<i64: 8, 256>}, {transform_indices = @transform_1, window_bounds = array<i64: 8, 1>}, {transform_indices = @transform_2, window_bounds = array<i64: 8, 32>}, {transform_indices = @transform_3, window_bounds = array<i64: 8, 32>}, {transform_indices = @transform_4, window_bounds = array<i64: 1, 128>}, {transform_indices = @transform_5, window_bounds = array<i64: 1, 128>}]} {
    %c8_i32 = arith.constant 8 : i32
    %0 = arith.muli %arg0, %c8_i32 : i32
    %1 = tpu.iota {dimensions = array<i32: 0>} : vector<8x1xi32>
    %2 = vector.broadcast %0 : i32 to vector<8x1xi32>
    %3 = arith.addi %2, %1 : vector<8x1xi32>
    %c8_i32_0 = arith.constant 8 : i32
    %4 = vector.broadcast %c8_i32_0 : i32 to vector<8x1xi32>
    %5 = arith.cmpi slt, %3, %4 : vector<8x1xi32>
    %c0 = arith.constant 0 : index
    %c0_1 = arith.constant 0 : index
    %6 = vector.load %arg1[%c0, %c0_1] : memref<8x256xf32, #tpu.memory_space<vmem>>, vector<8x256xf32>
    %7 = tpu.iota {dimensions = array<i32: 1>} : vector<8x256xi32>
    %c0_2 = arith.constant 0 : index
    %c0_3 = arith.constant 0 : index
    %8 = vector.load %arg2[%c0_2, %c0_3] : memref<8x1xi32, #tpu.memory_space<vmem>>, vector<8x1xi32>
    %9 = vector.broadcast %8 : vector<8x1xi32> to vector<8x256xi32>
    %10 = arith.cmpi eq, %7, %9 : vector<8x256xi32>
    %cst = arith.constant 0.000000e+00 : f32
    %11 = vector.broadcast %cst : f32 to vector<8x256xf32>
    %12 = arith.select %10, %6, %11 : vector<8x256xi1>, vector<8x256xf32>
    %cst_4 = arith.constant dense<0.000000e+00> : vector<8xf32>
    %13 = vector.multi_reduction <add>, %12, %cst_4 [1] : vector<8x256xf32> to vector<8xf32>
    %14 = vector.shape_cast %13 : vector<8xf32> to vector<8x1xf32>
    %cst_5 = arith.constant dense<0xFF800000> : vector<8xf32>
    %15 = vector.multi_reduction <maximumf>, %6, %cst_5 [1] : vector<8x256xf32> to vector<8xf32>
    %16 = vector.shape_cast %15 : vector<8xf32> to vector<8x1xf32>
    %17 = vector.broadcast %16 : vector<8x1xf32> to vector<8x256xf32>
    %18 = arith.subf %6, %17 : vector<8x256xf32>
    %19 = math.exp %18 : vector<8x256xf32>
    %cst_6 = arith.constant dense<0.000000e+00> : vector<8xf32>
    %20 = vector.multi_reduction <add>, %19, %cst_6 [1] : vector<8x256xf32> to vector<8xf32>
    %21 = vector.shape_cast %20 : vector<8xf32> to vector<8x1xf32>
    %22 = math.log %21 : vector<8x1xf32>
    %23 = arith.addf %22, %16 : vector<8x1xf32>
    %24 = arith.subf %23, %14 : vector<8x1xf32>
    %c0_7 = arith.constant 0 : index
    %c0_8 = arith.constant 0 : index
    %25 = vector.load %arg3[%c0_7, %c0_8] : memref<8x32xf32, #tpu.memory_space<vmem>>, vector<8x32xf32>
    %c0_9 = arith.constant 0 : index
    %c0_10 = arith.constant 0 : index
    %26 = vector.load %arg4[%c0_9, %c0_10] : memref<8x32xf32, #tpu.memory_space<vmem>>, vector<8x32xf32>
    %27 = math.exp %26 : vector<8x32xf32>
    %28 = arith.subf %27, %26 : vector<8x32xf32>
    %29 = arith.mulf %25, %25 : vector<8x32xf32>
    %30 = arith.addf %28, %29 : vector<8x32xf32>
    %cst_11 = arith.constant 1.000000e+00 : f32
    %31 = vector.broadcast %cst_11 : f32 to vector<8x32xf32>
    %32 = arith.subf %30, %31 : vector<8x32xf32>
    %cst_12 = arith.constant dense<0.000000e+00> : vector<8xf32>
    %33 = vector.multi_reduction <add>, %32, %cst_12 [1] : vector<8x32xf32> to vector<8xf32>
    %34 = vector.shape_cast %33 : vector<8xf32> to vector<8x1xf32>
    %cst_13 = arith.constant 5.000000e-01 : f32
    %35 = vector.broadcast %cst_13 : f32 to vector<8x1xf32>
    %36 = arith.mulf %35, %34 : vector<8x1xf32>
    %cst_14 = arith.constant 0.000000e+00 : f32
    %37 = vector.broadcast %cst_14 : f32 to vector<8x1xf32>
    %38 = arith.select %5, %24, %37 : vector<8x1xi1>, vector<8x1xf32>
    %39 = vector.shape_cast %38 : vector<8x1xf32> to vector<1x8x1xf32>
    %cst_15 = arith.constant dense<0.000000e+00> : vector<1xf32>
    %40 = vector.multi_reduction <add>, %39, %cst_15 [1, 2] : vector<1x8x1xf32> to vector<1xf32>
    %41 = vector.shape_cast %40 : vector<1xf32> to vector<1x1x1xf32>
    %42 = vector.extract %41[0, 0, 0] : f32 from vector<1x1x1xf32>
    %cst_16 = arith.constant 0.000000e+00 : f32
    %43 = vector.broadcast %cst_16 : f32 to vector<8x1xf32>
    %44 = arith.select %5, %36, %43 : vector<8x1xi1>, vector<8x1xf32>
    %45 = vector.shape_cast %44 : vector<8x1xf32> to vector<1x8x1xf32>
    %cst_17 = arith.constant dense<0.000000e+00> : vector<1xf32>
    %46 = vector.multi_reduction <add>, %45, %cst_17 [1, 2] : vector<1x8x1xf32> to vector<1xf32>
    %47 = vector.shape_cast %46 : vector<1xf32> to vector<1x1x1xf32>
    %48 = vector.extract %47[0, 0, 0] : f32 from vector<1x1x1xf32>
    %49 = vector.broadcast %42 : f32 to vector<1x128xf32>
    %c0_18 = arith.constant 0 : index
    %c0_19 = arith.constant 0 : index
    %50 = vector.load %arg5[%c0_18, %c0_19] : memref<1x128xf32, #tpu.memory_space<vmem>>, vector<1x128xf32>
    tpu.vector_store %arg5[%c0_18, %c0_19], %49 {strides = array<i32>} : memref<1x128xf32, #tpu.memory_space<vmem>>, vector<1x128xf32>,
    %51 = vector.broadcast %48 : f32 to vector<1x128xf32>
    %c0_20 = arith.constant 0 : index
    %c0_21 = arith.constant 0 : index
    %52 = vector.load %arg6[%c0_20, %c0_21] : memref<1x128xf32, #tpu.memory_space<vmem>>, vector<1x128xf32>
    tpu.vector_store %arg6[%c0_20, %c0_21], %51 {strides = array<i32>} : memref<1x128xf32, #tpu.memory_space<vmem>>, vector<1x128xf32>,
    return
  }
  func.func @transform_0(%arg0: i32) -> (i32, i32) {
    %c0_i32 = arith.constant 0 : i32
    %c0_i32_0 = arith.constant 0 : i32
    return %arg0, %c0_i32 : i32, i32
  }
  func.func @transform_1(%arg0: i32) -> (i32, i32) {
    %c0_i32 = arith.constant 0 : i32
    %c0_i32_0 = arith.constant 0 : i32
    return %arg0, %c0_i32 : i32, i32
  }
  func.func @transform_2(%arg0: i32) -> (i32, i32) {
    %c0_i32 = arith.constant 0 : i32
    %c0_i32_0 = arith.constant 0 : i32
    return %arg0, %c0_i32 : i32, i32
  }
  func.func @transform_3(%arg0: i32) -> (i32, i32) {
    %c0_i32 = arith.constant 0 : i32
    %c0_i32_0 = arith.constant 0 : i32
    return %arg0, %c0_i32 : i32, i32
  }
  func.func @transform_4(%arg0: i32) -> (i32, i32) {
    %c0_i32 = arith.constant 0 : i32
    %c0_i32_0 = arith.constant 0 : i32
    return %arg0, %c0_i32 : i32, i32
  }
  func.func @transform_5(%arg0: i32) -> (i32, i32) {
    %c0_i32 = arith.constant 0 : i32
    %c0_i32_0 = arith.constant 0 : i32
    return %arg0, %c0_i32 : i32, i32
  }
}

</mosaic_0001>

<llo_original>
// kernel: _multvae_partials.1
$region0: #{_multvae_partials.1}
  #allocation0 [shape = 'u32[]', space=smem, size = 0x4, offset = 0x4, fixed_abs, tag = 'smem constant byte address 0x4 - core index']
  #allocation1 [shape = 'u32[144,128]{1,0:T(1,128)}', space=vmem, size = 0x12000, scoped, tag = 'internal scratch']
  %s0 = inlined_call_operand.hbm [shape: f32[8,256], index: 0, kind: input, shape index: {}]
  %s1 = inlined_call_operand.vmem [shape: s32[8,1], index: 1, kind: input, shape index: {}]
  %s2 = inlined_call_operand.vmem [shape: f32[8,32], index: 2, kind: input, shape index: {}]
  %s3 = inlined_call_operand.vmem [shape: f32[8,32], index: 3, kind: input, shape index: {}]
  %s4 = inlined_call_operand.vmem [shape: f32[1,128], index: 4, kind: output, shape index: {0}]
  %s5 = inlined_call_operand.vmem [shape: f32[1,128], index: 5, kind: output, shape index: {1}]
  %6 = xla_tuple %s4, %s5
  %s7 = sld [smem:[#allocation0]]
  $region38: #{_multvae_partials.1} parent=0
    _
  %s9 = ssub.s32 1, %s7
  %s10 = scalar_select 0, %s9, %s7
  $region1: #{_multvae_partials.1} parent=0
    #allocation2 [shape = 'u8[8192]{0}', space=vmem, size = 0x2000, scoped, tag = 'input window, operand 0, single buffered']
    #allocation3 [shape = 's32[1]{0}', space=sflag, size = 0x4, scoped, tag = 'scoped memory for _multvae_partials.1']
    %11 = vsyncpa [#allocation3], 0
    // Predicated region
    $region2: #{_multvae_partials.1} parent=1 // pred_check
      _
    $region3: #{_multvae_partials.1} parent=1 // pred_check_branch
      %13 = sbr.rel (0) target = $region5
    $region4: #{_multvae_partials.1} parent=1 // pred_region
      %s15 = ssub.s32 256, 256
      %16 = vsyncadd [#allocation3], %s15
      %s18 = sshll.u32 [#allocation2], 4
      %s19 = int_to_ptr.vmem [resolvable:$true] %s18
      %21 = dma.hbm_to_vmem [thread:$0]  %s0, 256, %s19, [#allocation3]
    $region5: #{_multvae_partials.1} parent=1 // pred_fallthru
      _
    // Predicated region
    $region6: #{_multvae_partials.1} parent=1 // pred_check
      _
    $region7: #{_multvae_partials.1} parent=1 // pred_check_branch
      %23 = sbr.rel (0) target = $region9
    $region8: #{_multvae_partials.1} parent=1 // pred_region
      _
    $region9: #{_multvae_partials.1} parent=1 // pred_fallthru
      _
    // Predicated region
    $region10: #{_multvae_partials.1} parent=1 // pred_check
      _
    $region11: #{_multvae_partials.1} parent=1 // pred_check_branch
      %25 = sbr.rel (0) target = $region13
    $region12: #{_multvae_partials.1} parent=1 // pred_region
      _
    $region13: #{_multvae_partials.1} parent=1 // pred_fallthru
      _
    // Predicated region
    $region14: #{_multvae_partials.1} parent=1 // pred_check
      _
    $region15: #{_multvae_partials.1} parent=1 // pred_check_branch
      %27 = sbr.rel (0) target = $region17
    $region16: #{_multvae_partials.1} parent=1 // pred_region
      _
    $region17: #{_multvae_partials.1} parent=1 // pred_fallthru
      _
    // Predicated region
    $region18: #{_multvae_partials.1} parent=1 // pred_check
      _
    $region19: #{_multvae_partials.1} parent=1 // pred_check_branch
      %29 = sbr.rel (0) target = $region21
    $region20: #{_multvae_partials.1} parent=1 // pred_region
      %30 = dma.done [#allocation3], 256
    $region21: #{_multvae_partials.1} parent=1 // pred_fallthru
      _
    %s31 = smul.u32 0, 8
    %v32 = vlaneseq
    %v33 = vshrl.u32 %v32, 7
    %v34 = vstv %s31
    %v35 = vadd.s32 %v34, %v33
    %vm36 = vcmp.lt.s32.totalorder %v35, 8
    %v37 = vld [vmem:[#allocation2] sm:$0xff]
    %v38 = vld [vmem:[#allocation2 + $0x8] sm:$0xff]
    %v39 = vlaneseq
    %v40 = vand.u32 %v39, 127
    %v41 = vadd.s32 %v40, 128
    %v42 = vld [vmem:[%s1] sm:$0xff]
    %43 = vset.pattern.permute.xlu0 0
    %44 = vperm.xlu0 %43, %v42
    %v45 = vpop.permute.xlu0 %44
    %vm46 = vcmp.eq.s32.totalorder %v40, %v45
    %vm47 = vcmp.eq.s32.totalorder %v41, %v45
    %v48 = vsel %vm46, %v37, 0.0
    %v49 = vsel %vm47, %v38, 0.0
    %v50 = vadd.f32 %v48, %v49
    %51 = vadd.xlane.f32.xlu0 %v50
    %v52 = vpop.xlane.xlu0 %51
    %v53 = vmax.f32 %v37, %v38
    %54 = vmax.xlane.f32.xlu0 %v53
    %v55 = vpop.xlane.xlu0 %54
    %v56 = vsub.f32 %v37, %v55
    %v57 = vsub.f32 %v38, %v55
    %v58 = vmul.f32 %v56, 1.442695
    %v59 = vpow.pop %v58
    %v60 = vmul.f32 %v57, 1.442695
    %v61 = vpow.pop %v60
    %v62 = vadd.f32 %v59, %v61
    %63 = vadd.xlane.f32.xlu0 %v62
    %v64 = vpop.xlane.xlu0 %63
    %v65 = vlog2.pop %v64
    %v66 = vmul.f32 %v65, 0.6931472
    %v67 = vadd.f32 %v66, %v55
    %v68 = vsub.f32 %v67, %v52
    %v69 = vld [vmem:[%s2] sm:$0xff]
    %v70 = vld [vmem:[%s3] sm:$0xff]
    %v71 = vmul.f32 %v70, 1.442695
    %v72 = vpow.pop %v71
    %v73 = vsub.f32 %v72, %v70
    %v74 = vmul.f32 %v69, %v69
    %v75 = vadd.f32 %v73, %v74
    %v76 = vsub.f32 %v75, 1.0
    %vm77 = vcmask 261120
    %v78 = vsel %vm77, %v76, 0.0
    %79 = vadd.xlane.f32.xlu0 %v78
    %v80 = vpop.xlane.xlu0 %79
    %v81 = vmul.f32 %v80, 0.5
    %v82 = vsel %vm36, %v68, 0.0
    %vm83 = vcmask 7168
    %v84 = vsel %vm83, %v82, 0.0
    %85 = vadd.xlane.f32.xlu0 %v84
    %v86 = vpop.xlane.xlu0 %85
    %v87 = vrot.slane %v86, 4
    %v88 = vadd.f32 %v86, %v87
    %v89 = vrot.slane %v88, 2
    %v90 = vadd.f32 %v88, %v89
    %v91 = vrot.slane %v90, 1
    %v92 = vadd.f32 %v90, %v91
    %s93 = vtos %v92
    %v94 = vsel %vm36, %v81, 0.0
    %v95 = vsel %vm83, %v94, 0.0
    %96 = vadd.xlane.f32.xlu0 %v95
    %v97 = vpop.xlane.xlu0 %96
    %v98 = vrot.slane %v97, 4
    %v99 = vadd.f32 %v97, %v98
    %v100 = vrot.slane %v99, 2
    %v101 = vadd.f32 %v99, %v100
    %v102 = vrot.slane %v101, 1
    %v103 = vadd.f32 %v101, %v102
    %s104 = vtos %v103
    %v105 = vstv %s93
    %106 = vst [vmem:[%s4] sm:$0x1] %v105
    %v107 = vstv %s104
    %108 = vst [vmem:[%s5] sm:$0x1] %v107
    // Predicated region
    $region22: #{_multvae_partials.1} parent=1 // pred_check
      _
    $region23: #{_multvae_partials.1} parent=1 // pred_check_branch
      %110 = sbr.rel (0) target = $region25
    $region24: #{_multvae_partials.1} parent=1 // pred_region
      _
    $region25: #{_multvae_partials.1} parent=1 // pred_fallthru
      _
    // Predicated region
    $region26: #{_multvae_partials.1} parent=1 // pred_check
      _
    $region27: #{_multvae_partials.1} parent=1 // pred_check_branch
      %112 = sbr.rel (0) target = $region29
    $region28: #{_multvae_partials.1} parent=1 // pred_region
      _
    $region29: #{_multvae_partials.1} parent=1 // pred_fallthru
      _
    // Predicated region
    $region30: #{_multvae_partials.1} parent=1 // pred_check
      _
    $region31: #{_multvae_partials.1} parent=1 // pred_check_branch
      %114 = sbr.rel (0) target = $region33
    $region32: #{_multvae_partials.1} parent=1 // pred_region
      _
    $region33: #{_multvae_partials.1} parent=1 // pred_fallthru
      _
    // Predicated region
    $region34: #{_multvae_partials.1} parent=1 // pred_check
      _
    $region35: #{_multvae_partials.1} parent=1 // pred_check_branch
      %116 = sbr.rel (0) target = $region37
    $region36: #{_multvae_partials.1} parent=1 // pred_region
      _
    $region37: #{_multvae_partials.1} parent=1 // pred_fallthru
      _
    %117 = vsyncpa [#allocation3], 1

</llo_original>
